<compile_context>
chip_gen: v7x
topology: tpu7x:2x2x1
jax: 0.10.0
libtpu: 0.0.40
codegen_flags: <defaults>
</compile_context>

<pallas_src>
import functools

import jax
import jax.numpy as jnp
import numpy as np
from jax.experimental import pallas as pl
from jax.experimental.pallas import tpu as pltpu

D_MODEL = 1
N_HEADS = 1


def _attn_kernel(q_ref, kv_ref, ot_ref, *, neg_inv_scale, mxu_bf16):
    # q_ref / kv_ref: (Bt, S, D); ot_ref: (Bt, D, S)  (transposed output).
    # kv_ref serves both K and V (the module has k = v = x2).
    q = q_ref[...].astype(jnp.float32) * jnp.float32(neg_inv_scale)
    kv = kv_ref[...].astype(jnp.float32)

    qm = q.astype(jnp.bfloat16) if mxu_bf16 else q
    km = kv.astype(jnp.bfloat16) if mxu_bf16 else kv

    # scaled logits: s[b,i,j] = neg_inv_scale * sum_d q[b,i,d] * k[b,j,d]
    # (NT contraction on the last dims; k.T is never materialized)
    s = jnp.einsum("bqd,bkd->bqk", qm, km, preferred_element_type=jnp.float32)

    # Numerically stable softmax; normalization deferred past P@V so the
    # scaling touches D*S elements instead of S*S.
    m = jnp.max(s, axis=-1, keepdims=True)
    e = jnp.exp(s - m)
    denom = jnp.sum(e, axis=-1)                      # (Bt, S)
    inv = pl.reciprocal(denom, approx=True)          # EUP slot (nearly free)
    inv = inv * (2.0 - denom * inv)                  # one Newton step -> ~f32 exact

    # TODO(synk): dropout with p > 0 not implemented; the module uses p=0.0 (identity).

    em = e.astype(jnp.bfloat16) if mxu_bf16 else e
    vm = km if mxu_bf16 else kv

    # Fused epilogue transpose: O^T[b,d,q] = sum_k v[b,k,d] * P[b,q,k].
    # Written as a single dot_general so no explicit v transpose / relayout
    # copy is materialized in VMEM.
    ot = jnp.einsum("bkd,bqk->bdq", vm, em, preferred_element_type=jnp.float32)
    ot = ot * inv[:, None, :]                        # per-query normalization
    ot_ref[...] = ot.astype(ot_ref.dtype)


def attention_forward(x1, x2, n_heads=N_HEADS, d_model=D_MODEL, *, mxu_bf16=False):
    """Reproduces Model.forward (q = x1, k = v = x2)."""
    B, S, D = x1.shape
    assert x2.shape == (B, S, D)
    neg_inv_scale = -1.0 / float(np.sqrt(d_model))

    # Batch tile: fat steps amortize per-step overhead, but keep >= 2 grid
    # steps when B > 1 so the parallel axis shards across both v7x TCs.
    bt = min(B, 64)
    if B > 1:
        bt = min(bt, (B + 1) // 2)
    grid_b = pl.cdiv(B, bt)

    # VMEM budget: q + kv inputs, O^T output (double-buffered by the pipeline)
    # plus the (S,S) logits / exp intermediates, with generous headroom.
    # Clamp below v7x's 64 MiB physical VMEM.
    per_b_bytes = (2 * S * D + D * S + 2 * S * S) * 4
    vmem_limit = int(min(48 << 20, max(16 << 20, 4 * bt * per_b_bytes)))

    kernel = functools.partial(
        _attn_kernel, neg_inv_scale=neg_inv_scale, mxu_bf16=mxu_bf16
    )

    out_t = pl.pallas_call(
        kernel,
        out_shape=jax.ShapeDtypeStruct((B, D, S), x1.dtype),
        grid_spec=pltpu.PrefetchScalarGridSpec(
            num_scalar_prefetch=0,
            grid=(grid_b,),
            in_specs=[
                pl.BlockSpec((bt, S, D), lambda b: (b, 0, 0)),   # q  (x1)
                pl.BlockSpec((bt, S, D), lambda b: (b, 0, 0)),   # kv (x2, single copy)
            ],
            out_specs=pl.BlockSpec((bt, D, S), lambda b: (b, 0, 0)),
        ),
        compiler_params=pltpu.CompilerParams(
            # independent batch axis -> megacore sharding on v7x, no-op on v5e/v6e
            dimension_semantics=("parallel",),
            vmem_limit_bytes=vmem_limit,
        ),
    )(x1, x2)

    # PyTorch epilogue: output.transpose(-1,-2).reshape((B, 1, -1, D)).
    # The kernel already wrote the transposed (B, D, S) buffer, so this is a
    # pure flat-byte-order reshape: no data movement.
    return out_t.reshape((B, 1, -1, D))


def _reference(x1, x2, d_model=D_MODEL):
    scale = np.sqrt(d_model)
    qk = jnp.einsum("bsd,btd->bst", x1, x2)
    scaled = qk / (-scale)
    p = jax.nn.softmax(scaled, axis=-1)
    o = jnp.einsum("bst,btd->bsd", p, x2)
    return jnp.swapaxes(o, -1, -2).reshape((x1.shape[0], 1, -1, x2.shape[-1]))


if __name__ == "__main__":
    key = jax.random.PRNGKey(0)
    k1, k2, k3, k4 = jax.random.split(key, 4)

    # Shapes implied by the module's example inputs: (1, 64, 32)
    x1 = jax.random.normal(k1, (1, 64, 32), dtype=jnp.float32)
    x2 = jax.random.normal(k2, (1, 64, 32), dtype=jnp.float32)

    out = attention_forward(x1, x2)
    out = jax.block_until_ready(out)
    assert out.shape == (1, 1, 64, 32), out.shape
    np.testing.assert_allclose(np.asarray(out), np.asarray(_reference(x1, x2)),
                               rtol=1e-4, atol=1e-5)

    # Also exercise the batched / multi-step-grid path (B > 1 -> >= 2 grid steps).
    y1 = jax.random.normal(k3, (4, 64, 32), dtype=jnp.float32)
    y2 = jax.random.normal(k4, (4, 64, 32), dtype=jnp.float32)
    out_b = jax.block_until_ready(attention_forward(y1, y2))
    assert out_b.shape == (4, 1, 64, 32), out_b.shape
    np.testing.assert_allclose(np.asarray(out_b), np.asarray(_reference(y1, y2)),
                               rtol=1e-4, atol=1e-5)

    print("KERNEL_OK")
</pallas_src>

<mosaic_0001>
module attributes {stable_mosaic.version = 11 : i64} {
  func.func @_attn_kernel(%arg0: i32, %arg1: memref<1x64x32xf32, #tpu.memory_space<vmem>>, %arg2: memref<1x64x32xf32, #tpu.memory_space<vmem>>, %arg3: memref<1x32x64xf32, #tpu.memory_space<vmem>>) attributes {dimension_semantics = [#tpu.dimension_semantics<parallel>], iteration_bounds = array<i64: 1>, scalar_prefetch = 0 : i64, scratch_operands = 0 : i64, tpu.core_type = #tpu.core_type<tc>, window_params = [{transform_indices = @transform_0, window_bounds = array<i64: 1, 64, 32>}, {transform_indices = @transform_1, window_bounds = array<i64: 1, 64, 32>}, {transform_indices = @transform_2, window_bounds = array<i64: 1, 32, 64>}]} {
    %c0 = arith.constant 0 : index
    %c0_0 = arith.constant 0 : index
    %c0_1 = arith.constant 0 : index
    %0 = vector.load %arg1[%c0, %c0_0, %c0_1] : memref<1x64x32xf32, #tpu.memory_space<vmem>>, vector<1x64x32xf32>
    %cst = arith.constant -1.000000e+00 : f32
    %1 = vector.broadcast %cst : f32 to vector<1x64x32xf32>
    %2 = arith.mulf %0, %1 : vector<1x64x32xf32>
    %c0_2 = arith.constant 0 : index
    %c0_3 = arith.constant 0 : index
    %c0_4 = arith.constant 0 : index
    %3 = vector.load %arg2[%c0_2, %c0_3, %c0_4] : memref<1x64x32xf32, #tpu.memory_space<vmem>>, vector<1x64x32xf32>
    "tpu.trace_start"() <{level = 10 : i32, message = "bqd,bkd->bqk"}> : () -> ()
    %cst_5 = arith.constant dense<0.000000e+00> : vector<1x64x64xf32>
    %4 = tpu.matmul %2, %3, %cst_5 {dimension_numbers = #tpu.dot_dimension_numbers<[2], [2], [1], [1], [0, 0, 0, 1, 1, 1], [0], [0]>} : vector<1x64x32xf32>, vector<1x64x32xf32>, vector<1x64x64xf32> -> vector<1x64x64xf32>
    "tpu.trace_stop"() : () -> ()
    %cst_6 = arith.constant dense<0xFF800000> : vector<1x64xf32>
    %5 = vector.multi_reduction <maximumf>, %4, %cst_6 [2] : vector<1x64x64xf32> to vector<1x64xf32>
    %6 = vector.shape_cast %5 : vector<1x64xf32> to vector<1x64x1xf32>
    %7 = vector.broadcast %6 : vector<1x64x1xf32> to vector<1x64x64xf32>
    %8 = arith.subf %4, %7 : vector<1x64x64xf32>
    %9 = math.exp %8 : vector<1x64x64xf32>
    %cst_7 = arith.constant dense<0.000000e+00> : vector<1x64xf32>
    %10 = vector.multi_reduction <add>, %9, %cst_7 [2] : vector<1x64x64xf32> to vector<1x64xf32>
    %11 = tpu.reciprocal %10 {approx = true} : vector<1x64xf32> -> vector<1x64xf32>
    %12 = arith.mulf %10, %11 : vector<1x64xf32>
    %cst_8 = arith.constant 2.000000e+00 : f32
    %13 = vector.broadcast %cst_8 : f32 to vector<1x64xf32>
    %14 = arith.subf %13, %12 : vector<1x64xf32>
    %15 = arith.mulf %11, %14 : vector<1x64xf32>
    "tpu.trace_start"() <{level = 10 : i32, message = "bkd,bqk->bdq"}> : () -> ()
    %cst_9 = arith.constant dense<0.000000e+00> : vector<1x32x64xf32>
    %16 = tpu.matmul %3, %9, %cst_9 {dimension_numbers = #tpu.dot_dimension_numbers<[1], [2], [2], [1], [0, 0, 0, 2, 1, 1], [0], [0]>} : vector<1x64x32xf32>, vector<1x64x64xf32>, vector<1x32x64xf32> -> vector<1x32x64xf32>
    "tpu.trace_stop"() : () -> ()
    %17 = vector.shape_cast %15 : vector<1x64xf32> to vector<1x1x64xf32>
    %18 = vector.broadcast %17 : vector<1x1x64xf32> to vector<1x32x64xf32>
    %19 = arith.mulf %16, %18 : vector<1x32x64xf32>
    %c0_10 = arith.constant 0 : index
    %c0_11 = arith.constant 0 : index
    %c0_12 = arith.constant 0 : index
    %20 = vector.load %arg3[%c0_10, %c0_11, %c0_12] : memref<1x32x64xf32, #tpu.memory_space<vmem>>, vector<1x32x64xf32>
    tpu.vector_store %arg3[%c0_10, %c0_11, %c0_12], %19 {strides = array<i32>} : memref<1x32x64xf32, #tpu.memory_space<vmem>>, vector<1x32x64xf32>,
    return
  }
  func.func @transform_0(%arg0: i32) -> (i32, i32, i32) {
    %c0_i32 = arith.constant 0 : i32
    %c0_i32_0 = arith.constant 0 : i32
    %c0_i32_1 = arith.constant 0 : i32
    return %arg0, %c0_i32, %c0_i32_0 : i32, i32, i32
  }
  func.func @transform_1(%arg0: i32) -> (i32, i32, i32) {
    %c0_i32 = arith.constant 0 : i32
    %c0_i32_0 = arith.constant 0 : i32
    %c0_i32_1 = arith.constant 0 : i32
    return %arg0, %c0_i32, %c0_i32_0 : i32, i32, i32
  }
  func.func @transform_2(%arg0: i32) -> (i32, i32, i32) {
    %c0_i32 = arith.constant 0 : i32
    %c0_i32_0 = arith.constant 0 : i32
    %c0_i32_1 = arith.constant 0 : i32
    return %arg0, %c0_i32, %c0_i32_0 : i32, i32, i32
  }
}

</mosaic_0001>

<llo_original>
// kernel: tpu_custom_call.1
$region0: #{tpu_custom_call.1}
  #allocation0 [shape = 'u32[]', space=smem, size = 0x4, offset = 0x4, fixed_abs, tag = 'smem constant byte address 0x4 - core index']
  #allocation1 [shape = 'u32[144,128]{1,0:T(1,128)}', space=vmem, size = 0x12000, scoped, tag = 'internal scratch']
  %s0 = inlined_call_operand.vmem [shape: f32[1,64,32], index: 0, kind: input, shape index: {}]
  %s1 = inlined_call_operand.vmem [shape: f32[1,64,32], index: 1, kind: input, shape index: {}]
  %s2 = inlined_call_operand.hbm [shape: f32[1,32,64], index: 2, kind: output, shape index: {}]
  %s3 = sld [smem:[#allocation0]]
  $region18: #{tpu_custom_call.1} parent=0
    _
  %s5 = ssub.s32 1, %s3
  %s6 = scalar_select 0, %s5, %s3
  $region1: #{tpu_custom_call.1} parent=0
    #allocation2 [shape = 'u8[16384]{0}', space=vmem, size = 0x4000, scoped, tag = 'output window, operand 0, single buffered']
    #allocation3 [shape = 's32[1]{0}', space=sflag, size = 0x4, scoped, tag = 'scoped memory for tpu_custom_call.1']
    %7 = vsyncpa [#allocation3], 0
    // Predicated region
    $region2: #{tpu_custom_call.1} parent=1 // pred_check
      _
    $region3: #{tpu_custom_call.1} parent=1 // pred_check_branch
      %9 = sbr.rel (0) target = $region5
    $region4: #{tpu_custom_call.1} parent=1 // pred_region
      _
    $region5: #{tpu_custom_call.1} parent=1 // pred_fallthru
      _
    // Predicated region
    $region6: #{tpu_custom_call.1} parent=1 // pred_check
      _
    $region7: #{tpu_custom_call.1} parent=1 // pred_check_branch
      %11 = sbr.rel (0) target = $region9
    $region8: #{tpu_custom_call.1} parent=1 // pred_region
      _
    $region9: #{tpu_custom_call.1} parent=1 // pred_fallthru
      _
    %v12 = vld [vmem:[%s0] sm:$0xff]
    %v13 = vld [vmem:[%s0 + $0x8] sm:$0xff]
    %v14 = vld [vmem:[%s0 + $0x10] sm:$0xff]
    %v15 = vld [vmem:[%s0 + $0x18] sm:$0xff]
    %v16 = vld [vmem:[%s0 + $0x20] sm:$0xff]
    %v17 = vld [vmem:[%s0 + $0x28] sm:$0xff]
    %v18 = vld [vmem:[%s0 + $0x30] sm:$0xff]
    %v19 = vld [vmem:[%s0 + $0x38] sm:$0xff]
    %v20 = vmul.f32 %v12, -1.0
    %v21 = vmul.f32 %v13, -1.0
    %v22 = vmul.f32 %v14, -1.0
    %v23 = vmul.f32 %v15, -1.0
    %v24 = vmul.f32 %v16, -1.0
    %v25 = vmul.f32 %v17, -1.0
    %v26 = vmul.f32 %v18, -1.0
    %v27 = vmul.f32 %v19, -1.0
    %v28 = vld [vmem:[%s1] sm:$0xff]
    %v29 = vld [vmem:[%s1 + $0x8] sm:$0xff]
    %v30 = vld [vmem:[%s1 + $0x10] sm:$0xff]
    %v31 = vld [vmem:[%s1 + $0x18] sm:$0xff]
    %v32 = vld [vmem:[%s1 + $0x20] sm:$0xff]
    %v33 = vld [vmem:[%s1 + $0x28] sm:$0xff]
    %v34 = vld [vmem:[%s1 + $0x30] sm:$0xff]
    %v35 = vld [vmem:[%s1 + $0x38] sm:$0xff]
    %vm36 = vcmask 261120
    %v38 = vsel %vm36, %v20, 0
    %v41 = vsel %vm36, %v21, 0
    %v44 = vsel %vm36, %v22, 0
    %v47 = vsel %vm36, %v23, 0
    %v50 = vsel %vm36, %v24, 0
    %v53 = vsel %vm36, %v25, 0
    %v56 = vsel %vm36, %v26, 0
    %v59 = vsel %vm36, %v27, 0
    %v62 = vsel %vm36, %v28, 0
    %v65 = vsel %vm36, %v29, 0
    %v68 = vsel %vm36, %v30, 0
    %v71 = vsel %vm36, %v31, 0
    %v74 = vsel %vm36, %v32, 0
    %v77 = vsel %vm36, %v33, 0
    %v80 = vsel %vm36, %v34, 0
    %v83 = vsel %vm36, %v35, 0
    %85 = vmatprep.subr.mxu0 0.0
    %86 = vmatpush1.xpose.msra.mxu0 %v62
    %87 = vmatprep.subr.mxu0 0.0
    %88 = vmatpush1.xpose.msra.mxu0 %v65
    %89 = vmatprep.subr.mxu0 0.0
    %90 = vmatpush1.xpose.msra.mxu0 %v68
    %91 = vmatprep.subr.mxu0 0.0
    %92 = vmatpush1.xpose.msra.mxu0 %v71
    %93 = vmatprep.subr.mxu0 0.0
    %94 = vmatpush1.xpose.msra.mxu0 %v74
    %95 = vmatprep.subr.mxu0 0.0
    %96 = vmatpush1.xpose.msra.mxu0 %v77
    %97 = vmatprep.subr.mxu0 0.0
    %98 = vmatpush1.xpose.msra.mxu0 %v80
    %99 = vmatprep.subr.mxu0 0.0
    %100 = vmatpush1.xpose.msra.mxu0 %v83
    %101 = vmatprep.subr.mxu0 0.0
    %102 = vmatpush1.xpose.msra.mxu0 0.0
    %103 = vmatprep.subr.mxu0 0.0
    %104 = vmatpush1.xpose.msra.mxu0 0.0
    %105 = vmatprep.subr.mxu0 0.0
    %106 = vmatpush1.xpose.msra.mxu0 0.0
    %107 = vmatprep.subr.mxu0 0.0
    %108 = vmatpush1.xpose.msra.mxu0 0.0
    %109 = vmatprep.subr.mxu0 0.0
    %110 = vmatpush1.xpose.msra.mxu0 0.0
    %111 = vmatprep.subr.mxu0 0.0
    %112 = vmatpush1.xpose.msra.mxu0 0.0
    %113 = vmatprep.subr.mxu0 0.0
    %114 = vmatpush1.xpose.msra.mxu0 0.0
    %115 = vmatprep.subr.mxu0 0.0
    %116 = vmatpush1.xpose.msra.mxu0 0.0
    %117 = vmatprep.subr.mxu0 0.0
    %118 = vmatpush1.xpose.msra.mxu0 0.0
    %119 = vmatprep.subr.mxu0 0.0
    %120 = vmatpush1.xpose.msra.mxu0 0.0
    %121 = vmatprep.subr.mxu0 0.0
    %122 = vmatpush1.xpose.msra.mxu0 0.0
    %123 = vmatprep.subr.mxu0 0.0
    %124 = vmatpush1.xpose.msra.mxu0 0.0
    %125 = vmatprep.subr.mxu0 0.0
    %126 = vmatpush1.xpose.msra.mxu0 0.0
    %127 = vmatprep.subr.mxu0 0.0
    %128 = vmatpush1.xpose.msra.mxu0 0.0
    %129 = vmatprep.subr.mxu0 0.0
    %130 = vmatpush1.xpose.msra.mxu0 0.0
    %131 = vmatprep.subr.mxu0 0.0
    %132 = vmatpush1.xpose.msra.mxu0 0.0
    %133 = vmatprep.subr.mxu0 0.0
    %134 = vmatpush1.xpose.msra.mxu0 0.0
    %135 = vmatprep.subr.mxu0 0.0
    %136 = vmatpush1.xpose.msra.mxu0 0.0
    %137 = vmatprep.subr.mxu0 0.0
    %138 = vmatpush1.xpose.msra.mxu0 0.0
    %139 = vmatprep.subr.mxu0 0.0
    %140 = vmatpush1.xpose.msra.mxu0 0.0
    %141 = vmatprep.subr.mxu0 0.0
    %142 = vmatpush1.xpose.msra.mxu0 0.0
    %143 = vmatprep.subr.mxu0 0.0
    %144 = vmatpush1.xpose.msra.mxu0 0.0
    %145 = vmatprep.subr.mxu0 0.0
    %146 = vmatpush1.xpose.msra.mxu0 0.0
    %147 = vmatprep.subr.mxu0 0.0
    %148 = vmatpush1.xpose.msra.mxu0 0.0
    %149 = vmatprep.mubr.f32.mxu0 0.0
    %150 = vmatmul.mubr.f32.gmra.mrb[0].mxu0 %v38
    %v151 = vpop.f32.mrb[0].mxu0
    %v152 = vadd.f32 0.0, %v151
    %v153 = vpop.f32.mrb[0].mxu0
    %154 = vmatprep.mubr.f32.mxu0 0.0
    %155 = vmatmul.mubr.f32.gmra.mrb[0].mxu0 %v41
    %v156 = vpop.f32.mrb[0].mxu0
    %v157 = vadd.f32 0.0, %v156
    %v158 = vpop.f32.mrb[0].mxu0
    %159 = vmatprep.mubr.f32.mxu0 0.0
    %160 = vmatmul.mubr.f32.gmra.mrb[0].mxu0 %v44
    %v161 = vpop.f32.mrb[0].mxu0
    %v162 = vadd.f32 0.0, %v161
    %v163 = vpop.f32.mrb[0].mxu0
    %164 = vmatprep.mubr.f32.mxu0 0.0
    %165 = vmatmul.mubr.f32.gmra.mrb[0].mxu0 %v47
    %v166 = vpop.f32.mrb[0].mxu0
    %v167 = vadd.f32 0.0, %v166
    %v168 = vpop.f32.mrb[0].mxu0
    %169 = vmatprep.mubr.f32.mxu0 0.0
    %170 = vmatmul.mubr.f32.gmra.mrb[0].mxu0 %v50
    %v171 = vpop.f32.mrb[0].mxu0
    %v172 = vadd.f32 0.0, %v171
    %v173 = vpop.f32.mrb[0].mxu0
    %174 = vmatprep.mubr.f32.mxu0 0.0
    %175 = vmatmul.mubr.f32.gmra.mrb[0].mxu0 %v53
    %v176 = vpop.f32.mrb[0].mxu0
    %v177 = vadd.f32 0.0, %v176
    %v178 = vpop.f32.mrb[0].mxu0
    %179 = vmatprep.mubr.f32.mxu0 0.0
    %180 = vmatmul.mubr.f32.gmra.mrb[0].mxu0 %v56
    %v181 = vpop.f32.mrb[0].mxu0
    %v182 = vadd.f32 0.0, %v181
    %v183 = vpop.f32.mrb[0].mxu0
    %184 = vmatprep.mubr.f32.mxu0 0.0
    %185 = vmatmul.mubr.f32.gmra.mrb[0].mxu0 %v59
    %v186 = vpop.f32.mrb[0].mxu0
    %v187 = vadd.f32 0.0, %v186
    %v188 = vpop.f32.mrb[0].mxu0
    %189 = vdwg.mxu0
    %vm190 = vcmask 523264
    %v191 = vsel %vm190, %v152, -inf
    %192 = vmax.xlane.f32.xlu0 %v191
    %v193 = vpop.xlane.xlu0 %192
    %v194 = vsel %vm190, %v157, -inf
    %195 = vmax.xlane.f32.xlu0 %v194
    %v196 = vpop.xlane.xlu0 %195
    %v197 = vsel %vm190, %v162, -inf
    %198 = vmax.xlane.f32.xlu0 %v197
    %v199 = vpop.xlane.xlu0 %198
    %v200 = vsel %vm190, %v167, -inf
    %201 = vmax.xlane.f32.xlu0 %v200
    %v202 = vpop.xlane.xlu0 %201
    %v203 = vsel %vm190, %v172, -inf
    %204 = vmax.xlane.f32.xlu0 %v203
    %v205 = vpop.xlane.xlu0 %204
    %v206 = vsel %vm190, %v177, -inf
    %207 = vmax.xlane.f32.xlu0 %v206
    %v208 = vpop.xlane.xlu0 %207
    %v209 = vsel %vm190, %v182, -inf
    %210 = vmax.xlane.f32.xlu0 %v209
    %v211 = vpop.xlane.xlu0 %210
    %v212 = vsel %vm190, %v187, -inf
    %213 = vmax.xlane.f32.xlu0 %v212
    %v214 = vpop.xlane.xlu0 %213
    %v215 = vsub.f32 %v152, %v193
    %v216 = vsub.f32 %v157, %v196
    %v217 = vsub.f32 %v162, %v199
    %v218 = vsub.f32 %v167, %v202
    %v219 = vsub.f32 %v172, %v205
    %v220 = vsub.f32 %v177, %v208
    %v221 = vsub.f32 %v182, %v211
    %v222 = vsub.f32 %v187, %v214
    %v223 = vmul.f32 %v215, 1.442695
    %v224 = vpow.pop %v223
    %v225 = vmul.f32 %v216, 1.442695
    %v226 = vpow.pop %v225
    %v227 = vmul.f32 %v217, 1.442695
    %v228 = vpow.pop %v227
    %v229 = vmul.f32 %v218, 1.442695
    %v230 = vpow.pop %v229
    %v231 = vmul.f32 %v219, 1.442695
    %v232 = vpow.pop %v231
    %v233 = vmul.f32 %v220, 1.442695
    %v234 = vpow.pop %v233
    %v235 = vmul.f32 %v221, 1.442695
    %v236 = vpow.pop %v235
    %v237 = vmul.f32 %v222, 1.442695
    %v238 = vpow.pop %v237
    %v239 = vsel %vm190, %v224, 0.0
    %240 = vadd.xlane.f32.xlu0 %v239
    %v241 = vpop.xlane.xlu0 %240
    %v242 = vsel %vm190, %v226, 0.0
    %243 = vadd.xlane.f32.xlu0 %v242
    %v244 = vpop.xlane.xlu0 %243
    %v245 = vsel %vm190, %v228, 0.0
    %246 = vadd.xlane.f32.xlu0 %v245
    %v247 = vpop.xlane.xlu0 %246
    %v248 = vsel %vm190, %v230, 0.0
    %249 = vadd.xlane.f32.xlu0 %v248
    %v250 = vpop.xlane.xlu0 %249
    %v251 = vsel %vm190, %v232, 0.0
    %252 = vadd.xlane.f32.xlu0 %v251
    %v253 = vpop.xlane.xlu0 %252
    %v254 = vsel %vm190, %v234, 0.0
    %255 = vadd.xlane.f32.xlu0 %v254
    %v256 = vpop.xlane.xlu0 %255
    %v257 = vsel %vm190, %v236, 0.0
    %258 = vadd.xlane.f32.xlu0 %v257
    %v259 = vpop.xlane.xlu0 %258
    %v260 = vsel %vm190, %v238, 0.0
    %261 = vadd.xlane.f32.xlu0 %v260
    %v262 = vpop.xlane.xlu0 %261
    %v263 = vrcp.pop %v241
    %v264 = vrcp.pop %v244
    %v265 = vrcp.pop %v247
    %v266 = vrcp.pop %v250
    %v267 = vrcp.pop %v253
    %v268 = vrcp.pop %v256
    %v269 = vrcp.pop %v259
    %v270 = vrcp.pop %v262
    %v271 = vmul.f32 %v241, %v263
    %v272 = vmul.f32 %v244, %v264
    %v273 = vmul.f32 %v247, %v265
    %v274 = vmul.f32 %v250, %v266
    %v275 = vmul.f32 %v253, %v267
    %v276 = vmul.f32 %v256, %v268
    %v277 = vmul.f32 %v259, %v269
    %v278 = vmul.f32 %v262, %v270
    %v279 = vsub.f32 2.0, %v271
    %v280 = vsub.f32 2.0, %v272
    %v281 = vsub.f32 2.0, %v273
    %v282 = vsub.f32 2.0, %v274
    %v283 = vsub.f32 2.0, %v275
    %v284 = vsub.f32 2.0, %v276
    %v285 = vsub.f32 2.0, %v277
    %v286 = vsub.f32 2.0, %v278
    %v287 = vmul.f32 %v263, %v279
    %v288 = vmul.f32 %v264, %v280
    %v289 = vmul.f32 %v265, %v281
    %v290 = vmul.f32 %v266, %v282
    %v291 = vmul.f32 %v267, %v283
    %v292 = vmul.f32 %v268, %v284
    %v293 = vmul.f32 %v269, %v285
    %v294 = vmul.f32 %v270, %v286
    %295 = vxpose.xlu0.b32.start [1/16] %v28, 128
    %296 = vxpose.xlu0.b32.cont [2/16] %v29, 128
    %297 = vxpose.xlu0.b32.cont [3/16] %v30, 128
    %298 = vxpose.xlu0.b32.cont [4/16] %v31, 128
    %299 = vxpose.xlu0.b32.cont [5/16] %v32, 128
    %300 = vxpose.xlu0.b32.cont [6/16] %v33, 128
    %301 = vxpose.xlu0.b32.cont [7/16] %v34, 128
    %302 = vxpose.xlu0.b32.cont [8/16] %v35, 128
    %303 = vxpose.xlu0.b32.cont [9/16] 0.0, 128
    %304 = vxpose.xlu0.b32.cont [10/16] 0.0, 128
    %305 = vxpose.xlu0.b32.cont [11/16] 0.0, 128
    %306 = vxpose.xlu0.b32.cont [12/16] 0.0, 128
    %307 = vxpose.xlu0.b32.cont [13/16] 0.0, 128
    %308 = vxpose.xlu0.b32.cont [14/16] 0.0, 128
    %309 = vxpose.xlu0.b32.cont [15/16] 0.0, 128
    %310 = vxpose.xlu0.b32.end [16/16] 0.0, 128
    %v311 = vpop.trf.xlu0
    %v312 = vpop.trf.xlu0
    %v313 = vpop.trf.xlu0
    %v314 = vpop.trf.xlu0
    %v315 = vpop.trf.xlu0
    %v316 = vpop.trf.xlu0
    %v317 = vpop.trf.xlu0
    %v318 = vpop.trf.xlu0
    %v319 = vpop.trf.xlu0
    %v320 = vpop.trf.xlu0
    %v321 = vpop.trf.xlu0
    %v322 = vpop.trf.xlu0
    %v323 = vpop.trf.xlu0
    %v324 = vpop.trf.xlu0
    %v325 = vpop.trf.xlu0
    %v326 = vpop.trf.xlu0
    %v328 = vsel %vm190, %v311, 0
    %v331 = vsel %vm190, %v312, 0
    %v334 = vsel %vm190, %v313, 0
    %v337 = vsel %vm190, %v314, 0
    %v340 = vsel %vm190, %v224, 0
    %v343 = vsel %vm190, %v226, 0
    %v346 = vsel %vm190, %v228, 0
    %v349 = vsel %vm190, %v230, 0
    %v352 = vsel %vm190, %v232, 0
    %v355 = vsel %vm190, %v234, 0
    %v358 = vsel %vm190, %v236, 0
    %v361 = vsel %vm190, %v238, 0
    %363 = vmatprep.subr.mxu0 0.0
    %364 = vmatpush1.xpose.msra.mxu0 %v340
    %365 = vmatprep.subr.mxu0 0.0
    %366 = vmatpush1.xpose.msra.mxu0 %v343
    %367 = vmatprep.subr.mxu0 0.0
    %368 = vmatpush1.xpose.msra.mxu0 %v346
    %369 = vmatprep.subr.mxu0 0.0
    %370 = vmatpush1.xpose.msra.mxu0 %v349
    %371 = vmatprep.subr.mxu0 0.0
    %372 = vmatpush1.xpose.msra.mxu0 %v352
    %373 = vmatprep.subr.mxu0 0.0
    %374 = vmatpush1.xpose.msra.mxu0 %v355
    %375 = vmatprep.subr.mxu0 0.0
    %376 = vmatpush1.xpose.msra.mxu0 %v358
    %377 = vmatprep.subr.mxu0 0.0
    %378 = vmatpush1.xpose.msra.mxu0 %v361
    %379 = vmatprep.subr.mxu0 0.0
    %380 = vmatpush1.xpose.msra.mxu0 0.0
    %381 = vmatprep.subr.mxu0 0.0
    %382 = vmatpush1.xpose.msra.mxu0 0.0
    %383 = vmatprep.subr.mxu0 0.0
    %384 = vmatpush1.xpose.msra.mxu0 0.0
    %385 = vmatprep.subr.mxu0 0.0
    %386 = vmatpush1.xpose.msra.mxu0 0.0
    %387 = vmatprep.subr.mxu0 0.0
    %388 = vmatpush1.xpose.msra.mxu0 0.0
    %389 = vmatprep.subr.mxu0 0.0
    %390 = vmatpush1.xpose.msra.mxu0 0.0
    %391 = vmatprep.subr.mxu0 0.0
    %392 = vmatpush1.xpose.msra.mxu0 0.0
    %393 = vmatprep.subr.mxu0 0.0
    %394 = vmatpush1.xpose.msra.mxu0 0.0
    %395 = vmatprep.subr.mxu0 0.0
    %396 = vmatpush1.xpose.msra.mxu0 0.0
    %397 = vmatprep.subr.mxu0 0.0
    %398 = vmatpush1.xpose.msra.mxu0 0.0
    %399 = vmatprep.subr.mxu0 0.0
    %400 = vmatpush1.xpose.msra.mxu0 0.0
    %401 = vmatprep.subr.mxu0 0.0
    %402 = vmatpush1.xpose.msra.mxu0 0.0
    %403 = vmatprep.subr.mxu0 0.0
    %404 = vmatpush1.xpose.msra.mxu0 0.0
    %405 = vmatprep.subr.mxu0 0.0
    %406 = vmatpush1.xpose.msra.mxu0 0.0
    %407 = vmatprep.subr.mxu0 0.0
    %408 = vmatpush1.xpose.msra.mxu0 0.0
    %409 = vmatprep.subr.mxu0 0.0
    %410 = vmatpush1.xpose.msra.mxu0 0.0
    %411 = vmatprep.subr.mxu0 0.0
    %412 = vmatpush1.xpose.msra.mxu0 0.0
    %413 = vmatprep.subr.mxu0 0.0
    %414 = vmatpush1.xpose.msra.mxu0 0.0
    %415 = vmatprep.subr.mxu0 0.0
    %416 = vmatpush1.xpose.msra.mxu0 0.0
    %417 = vmatprep.subr.mxu0 0.0
    %418 = vmatpush1.xpose.msra.mxu0 0.0
    %419 = vmatprep.subr.mxu0 0.0
    %420 = vmatpush1.xpose.msra.mxu0 0.0
    %421 = vmatprep.subr.mxu0 0.0
    %422 = vmatpush1.xpose.msra.mxu0 0.0
    %423 = vmatprep.subr.mxu0 0.0
    %424 = vmatpush1.xpose.msra.mxu0 0.0
    %425 = vmatprep.subr.mxu0 0.0
    %426 = vmatpush1.xpose.msra.mxu0 0.0
    %427 = vmatprep.mubr.f32.mxu0 0.0
    %428 = vmatmul.mubr.f32.gmra.mrb[0].mxu0 %v328
    %v429 = vpop.f32.mrb[0].mxu0
    %v430 = vadd.f32 0.0, %v429
    %v431 = vpop.f32.mrb[0].mxu0
    %432 = vmatprep.mubr.f32.mxu0 0.0
    %433 = vmatmul.mubr.f32.gmra.mrb[0].mxu0 %v331
    %v434 = vpop.f32.mrb[0].mxu0
    %v435 = vadd.f32 0.0, %v434
    %v436 = vpop.f32.mrb[0].mxu0
    %437 = vmatprep.mubr.f32.mxu0 0.0
    %438 = vmatmul.mubr.f32.gmra.mrb[0].mxu0 %v334
    %v439 = vpop.f32.mrb[0].mxu0
    %v440 = vadd.f32 0.0, %v439
    %v441 = vpop.f32.mrb[0].mxu0
    %442 = vmatprep.mubr.f32.mxu0 0.0
    %443 = vmatmul.mubr.f32.gmra.mrb[0].mxu0 %v337
    %v444 = vpop.f32.mrb[0].mxu0
    %v445 = vadd.f32 0.0, %v444
    %v446 = vpop.f32.mrb[0].mxu0
    %447 = vdwg.mxu0
    %v456 = vlaneseq
    %v457 = vand.u32 %v456, 127
    %v458 = vlaneseq
    %v459 = vshrl.u32 %v458, 7
    %v460 = vsub.s32 %v457, %v459
    %v461 = vrot.slane %v287, %v460
    %v462 = vadd.s32 %v457, 4294967288
    %v463 = vlaneseq
    %v464 = vshrl.u32 %v463, 7
    %v465 = vsub.s32 %v462, %v464
    %v466 = vrot.slane %v288, %v465
    %vm467 = vcmask 130112
    %v468 = vsel %vm467, %v466, %v461
    %v469 = vadd.s32 %v457, 4294967280
    %v470 = vlaneseq
    %v471 = vshrl.u32 %v470, 7
    %v472 = vsub.s32 %v469, %v471
    %v473 = vrot.slane %v289, %v472
    %vm474 = vcmask 195712
    %v475 = vsel %vm474, %v473, %v468
    %v476 = vadd.s32 %v457, 4294967272
    %v477 = vlaneseq
    %v478 = vshrl.u32 %v477, 7
    %v479 = vsub.s32 %v476, %v478
    %v480 = vrot.slane %v290, %v479
    %vm481 = vcmask 261312
    %v482 = vsel %vm481, %v480, %v475
    %v483 = vadd.s32 %v457, 4294967264
    %v484 = vlaneseq
    %v485 = vshrl.u32 %v484, 7
    %v486 = vsub.s32 %v483, %v485
    %v487 = vrot.slane %v291, %v486
    %vm488 = vcmask 326912
    %v489 = vsel %vm488, %v487, %v482
    %v490 = vadd.s32 %v457, 4294967256
    %v491 = vlaneseq
    %v492 = vshrl.u32 %v491, 7
    %v493 = vsub.s32 %v490, %v492
    %v494 = vrot.slane %v292, %v493
    %vm495 = vcmask 392512
    %v496 = vsel %vm495, %v494, %v489
    %v497 = vadd.s32 %v457, 4294967248
    %v498 = vlaneseq
    %v499 = vshrl.u32 %v498, 7
    %v500 = vsub.s32 %v497, %v499
    %v501 = vrot.slane %v293, %v500
    %vm502 = vcmask 458112
    %v503 = vsel %vm502, %v501, %v496
    %v504 = vadd.s32 %v457, 4294967240
    %v505 = vlaneseq
    %v506 = vshrl.u32 %v505, 7
    %v507 = vsub.s32 %v504, %v506
    %v508 = vrot.slane %v294, %v507
    %vm509 = vcmask 523712
    %v510 = vsel %vm509, %v508, %v503
    %vm511 = vcmask 1042434
    %v512 = vsel %vm511, %v510, %v510
    %vm513 = vcmask 1043459
    %v514 = vsel %vm513, %v510, %v512
    %vm515 = vcmask 1044484
    %v516 = vsel %vm515, %v510, %v514
    %vm517 = vcmask 1045509
    %v518 = vsel %vm517, %v510, %v516
    %vm519 = vcmask 1046534
    %v520 = vsel %vm519, %v510, %v518
    %vm521 = vcmask 1047559
    %v522 = vsel %vm521, %v510, %v520
    %v524 = vmul.f32 %v430, %v522
    %v525 = vmul.f32 %v435, %v522
    %v526 = vmul.f32 %v440, %v522
    %v527 = vmul.f32 %v445, %v522
    %528 = vst.msk [vmem:[#allocation2] sm:$0xff] %vm190, %v524
    %529 = vst.msk [vmem:[#allocation2 + $0x8] sm:$0xff] %vm190, %v525
    %530 = vst.msk [vmem:[#allocation2 + $0x10] sm:$0xff] %vm190, %v526
    %531 = vst.msk [vmem:[#allocation2 + $0x18] sm:$0xff] %vm190, %v527
    // Predicated region
    $region10: #{tpu_custom_call.1} parent=1 // pred_check
      _
    $region11: #{tpu_custom_call.1} parent=1 // pred_check_branch
      %533 = sbr.rel (0) target = $region13
    $region12: #{tpu_custom_call.1} parent=1 // pred_region
      %s535 = ssub.s32 512, 512
      %536 = vsyncadd [#allocation3], %s535
      %s537 = sshll.u32 [#allocation2], 4
      %s538 = int_to_ptr.vmem [resolvable:$true] %s537
      %543 = dma.vmem_to_hbm [thread:$0]  %s538, 512, %s2, [#allocation3], 128, 128, 8
    $region13: #{tpu_custom_call.1} parent=1 // pred_fallthru
      _
    // Predicated region
    $region14: #{tpu_custom_call.1} parent=1 // pred_check
      _
    $region15: #{tpu_custom_call.1} parent=1 // pred_check_branch
      %545 = sbr.rel (0) target = $region17
    $region16: #{tpu_custom_call.1} parent=1 // pred_region
      %546 = dma.done [#allocation3], 512
    $region17: #{tpu_custom_call.1} parent=1 // pred_fallthru
      _
    %547 = vsyncpa [#allocation3], 1

</llo_original>
